<compile_context>
chip_gen: v7x
topology: tpu7x:2x2x1
jax: 0.10.0
libtpu: 0.0.40
codegen_flags: <defaults>
</compile_context>

<pallas_src>
import functools

import jax
import jax.numpy as jnp
from jax.experimental import pallas as pl
from jax.experimental.pallas import tpu as pltpu


def set2set_kernel(idx_ref, xh_ref, xht_ref, wlstm_ref, blstm_ref, out_ref,
                   *, processing_steps: int, approx_recip: bool):
    Bb = out_ref.shape[0]                       # graphs per block (sublane-padded)
    N, H = xh_ref.shape
    cdt = xh_ref.dtype                          # matmul operand dtype (bf16 or f32)

    # Hoisted loads (JAX does not CSE broadcasts across the unrolled loop).
    xh = xh_ref[...]                            # [N, H]
    xh_t = xht_ref[...]                         # [H, N] (transpose hoisted to wrapper)
    w_lstm = wlstm_ref[...]                     # [3H, 4H]  (= [w_ih; w_hh] stacked)
    b_lstm = blstm_ref[...]                     # [1, 4H]

    # In-kernel membership mask from the raw index vector: mask[b, n] = (index[n] == g0 + b).
    g0 = pl.program_id(0) * Bb
    row_ids = jax.lax.broadcasted_iota(jnp.int32, (Bb, N), 0) + g0
    mask = idx_ref[...] == row_ids              # [Bb, N] bool
    neg_big = jnp.float32(-1e30)
    masked_bias = jnp.where(mask, jnp.float32(0.0), neg_big)   # hoisted, reused every step

    h = jnp.zeros((Bb, H), jnp.float32)
    c = jnp.zeros((Bb, H), jnp.float32)
    q_star = jnp.zeros((Bb, 2 * H), jnp.float32)

    def step(_, carry):
        h, c, q_star = carry

        # --- q, h = LSTM(q_star, (h, c)) : single fused MXU matmul per step ---
        zq = jnp.concatenate([q_star, h], axis=-1)                       # [Bb, 3H]
        gates = jnp.dot(zq, w_lstm, preferred_element_type=jnp.float32) + b_lstm
        i_g = jax.nn.sigmoid(gates[:, 0 * H:1 * H])
        f_g = jax.nn.sigmoid(gates[:, 1 * H:2 * H])
        g_g = jnp.tanh(gates[:, 2 * H:3 * H])
        o_g = jax.nn.sigmoid(gates[:, 3 * H:4 * H])
        c2 = f_g * c + i_g * g_g
        h2 = o_g * jnp.tanh(c2)
        q = h2                                                           # [Bb, H]

        # --- attention scores, lane-dense [Bb, N] (MXU, pre-transposed rhs) ---
        scores = jnp.dot(q.astype(cdt), xh_t,
                         preferred_element_type=jnp.float32)             # [Bb, N]
        e_bn = scores + masked_bias                                      # additive mask

        # --- segment softmax on the [Bb, N] slab ---
        seg_max = jnp.max(e_bn, axis=1, keepdims=True)                   # [Bb, 1]
        # Masked entries underflow to exactly 0 in exp -> no second select / temp needed.
        p = jnp.exp(e_bn - seg_max)                                      # [Bb, N]
        seg_sum = jnp.sum(p, axis=1, keepdims=True)                      # [Bb, 1]
        # Empty (padded) graphs: all entries masked -> zero r via a cheap [Bb,1] flag.
        has_nodes = (seg_max > jnp.float32(-1e29)).astype(jnp.float32)   # [Bb, 1]
        inv = has_nodes * pl.reciprocal(seg_sum + jnp.float32(1e-16),
                                        approx=approx_recip)             # [Bb, 1]

        # --- r_b = softmax(e)_b @ xh ; denominator folded into an H-wide multiply ---
        r = jnp.dot(p.astype(cdt), xh, preferred_element_type=jnp.float32) * inv

        return h2, c2, jnp.concatenate([q, r], axis=-1)

    if processing_steps <= 4:
        # Small fixed T: keep unrolled (LLO scheduling visibility).
        for _ in range(processing_steps):
            h, c, q_star = step(0, (h, c, q_star))
    else:
        # Large T: bound live ranges / compile time.
        h, c, q_star = jax.lax.fori_loop(0, processing_steps, step, (h, c, q_star))

    # Lane-dense store: pad 2H up to the 128-aligned output width; wrapper slices it off.
    pad = out_ref.shape[-1] - 2 * H
    if pad > 0:
        q_star = jnp.concatenate(
            [q_star, jnp.zeros((Bb, pad), jnp.float32)], axis=-1)
    out_ref[...] = q_star


def _default_vmem_limit():
    # ~75% of physical per-core VMEM: ~48 MiB on v7x (64 MiB), ~96 MiB on v5e/v6e (128 MiB),
    # instead of the conservative scoped defaults (16/32 MiB).
    cap = None
    try:
        cap = getattr(pltpu.get_tpu_info(), "vmem_capacity_bytes", None)
    except Exception:
        cap = None
    if not cap:
        cap = 128 * 1024 * 1024
    return min(int(cap) * 3 // 4, 100 * 1024 * 1024)


def set2set_pallas(x, index, w_lin, b_lin, w_ih, w_hh, bias, *,
                   processing_steps: int, hidden: int, dim_size: int,
                   b_block: int | None = None,
                   compute_dtype=jnp.bfloat16,
                   approx_recip: bool = True,
                   vmem_limit_bytes: int | None = None):
    N, _ = x.shape
    H = hidden
    B = dim_size

    # x = self.lin(x): computed ONCE in plain XLA (shared across all graph blocks),
    # and its transpose hoisted out of the kernel's T loop.
    xh_f32 = x.astype(jnp.float32) @ w_lin + b_lin                       # [N, H]
    xh = xh_f32.astype(compute_dtype)
    xh_t = xh_f32.T.astype(compute_dtype)                                # [H, N]

    idx2d = index.astype(jnp.int32).reshape(1, N)                        # [1, N]

    # Fused LSTM weight: gates = [q_star || h] @ [w_ih; w_hh] + bias.
    w_lstm = jnp.concatenate([w_ih, w_hh], axis=0)                       # [3H, 4H]

    # --- generation-aware blocking (sublane multiple of 8; grid >= 2 when B allows) ---
    if b_block is None:
        if B >= 512:
            b_block = 256                       # fills v6e/v7x 2x(256x256) MXU tiles
        elif B >= 16:
            b_block = max(8, ((-(-B // 2)) + 7) // 8 * 8)   # ~half the batch per block
        else:
            b_block = max(8, (B + 7) // 8 * 8)  # tiny batch: just sublane-pad
    B_pad = -(-B // b_block) * b_block          # padded rows are empty graphs (r -> 0)
    grid_b = B_pad // b_block

    out_lanes = max(128, ((2 * H + 127) // 128) * 128)                   # lane-dense output

    if vmem_limit_bytes is None:
        vmem_limit_bytes = _default_vmem_limit()

    kernel = functools.partial(set2set_kernel,
                               processing_steps=processing_steps,
                               approx_recip=approx_recip)
    full = lambda i: (0, 0)

    out_padded = pl.pallas_call(
        kernel,
        out_shape=jax.ShapeDtypeStruct((B_pad, out_lanes), jnp.float32),
        grid_spec=pltpu.PrefetchScalarGridSpec(
            num_scalar_prefetch=0,
            grid=(grid_b,),
            in_specs=[
                pl.BlockSpec((1, N), full),            # index (int32)
                pl.BlockSpec((N, H), full),            # xh
                pl.BlockSpec((H, N), full),            # xh^T
                pl.BlockSpec((3 * H, 4 * H), full),    # fused LSTM weight
                pl.BlockSpec((1, 4 * H), full),        # fused LSTM bias (b_ih + b_hh)
            ],
            out_specs=pl.BlockSpec((b_block, out_lanes), lambda i: (i, 0)),
        ),
        compiler_params=pltpu.CompilerParams(
            # Graph blocks are independent -> shardable across v7x's two TensorCores.
            dimension_semantics=("parallel",),
            vmem_limit_bytes=vmem_limit_bytes,
        ),
    )(idx2d, xh, xh_t, w_lstm, bias)

    return out_padded[:B, :2 * H]


def set2set_reference(x, index, dim_size, w_lin, b_lin, w_ih, w_hh, bias,
                      *, processing_steps: int, hidden: int):
    """Pure-JAX reference mirroring the PyTorch forward semantics."""
    H = hidden
    xh = x @ w_lin + b_lin
    B = dim_size
    h = jnp.zeros((B, H), jnp.float32)
    c = jnp.zeros((B, H), jnp.float32)
    q_star = jnp.zeros((B, 2 * H), jnp.float32)
    for _ in range(processing_steps):
        gates = q_star @ w_ih + h @ w_hh + bias
        i_g = jax.nn.sigmoid(gates[:, 0 * H:1 * H])
        f_g = jax.nn.sigmoid(gates[:, 1 * H:2 * H])
        g_g = jnp.tanh(gates[:, 2 * H:3 * H])
        o_g = jax.nn.sigmoid(gates[:, 3 * H:4 * H])
        c = f_g * c + i_g * g_g
        h = o_g * jnp.tanh(c)
        q = h
        e = jnp.sum(xh * q[index], axis=-1, keepdims=True)
        seg_max = jax.ops.segment_max(e, index, num_segments=B)
        exp_e = jnp.exp(e - seg_max[index])
        seg_sum = jax.ops.segment_sum(exp_e, index, num_segments=B)
        a = exp_e / (seg_sum[index] + 1e-16)
        r = jax.ops.segment_sum(a * xh, index, num_segments=B)
        q_star = jnp.concatenate([q, r], axis=-1)
    return q_star


if __name__ == "__main__":
    # Small, deterministic shapes consistent with the module:
    #   out_channels = 32 -> hidden_channels H = 16, processing_steps T = 3
    #   N = 16 nodes, F_in = 8 input features, dim_size B = 2 graphs
    N, F_IN, H, B, T = 16, 8, 16, 2, 3

    key = jax.random.PRNGKey(0)
    k_x, k_wl, k_bl, k_wih, k_whh, k_bih, k_bhh = jax.random.split(key, 7)

    x = jax.random.normal(k_x, (N, F_IN), dtype=jnp.float32)
    # graph assignment: first 9 nodes -> graph 0, remaining 7 -> graph 1
    index = jnp.concatenate([jnp.zeros((9,), jnp.int32), jnp.ones((7,), jnp.int32)])

    # Parameters (deterministic synthetic init; shapes follow nn.Linear / nn.LSTM)
    w_lin = 0.1 * jax.random.normal(k_wl, (F_IN, H), dtype=jnp.float32)       # Linear weight^T
    b_lin = 0.1 * jax.random.normal(k_bl, (1, H), dtype=jnp.float32)          # Linear bias
    w_ih = 0.1 * jax.random.normal(k_wih, (2 * H, 4 * H), dtype=jnp.float32)  # LSTM weight_ih^T
    w_hh = 0.1 * jax.random.normal(k_whh, (H, 4 * H), dtype=jnp.float32)      # LSTM weight_hh^T
    bias = (0.1 * jax.random.normal(k_bih, (1, 4 * H), dtype=jnp.float32)
            + 0.1 * jax.random.normal(k_bhh, (1, 4 * H), dtype=jnp.float32))  # b_ih + b_hh

    ref = set2set_reference(x, index, B, w_lin, b_lin[0], w_ih, w_hh, bias[0],
                            processing_steps=T, hidden=H)

    # Fast path: bf16 MXU operands + approx (EUP) reciprocal.
    out = set2set_pallas(x, index, w_lin, b_lin, w_ih, w_hh, bias,
                         processing_steps=T, hidden=H, dim_size=B,
                         compute_dtype=jnp.bfloat16, approx_recip=True)
    out = jax.block_until_ready(out)
    assert out.shape == (B, 2 * H)
    assert jnp.allclose(out, ref, atol=2e-2, rtol=2e-2), (out, ref)

    # Exact path: f32 operands + exact reciprocal, tight tolerance.
    out_f32 = set2set_pallas(x, index, w_lin, b_lin, w_ih, w_hh, bias,
                             processing_steps=T, hidden=H, dim_size=B,
                             compute_dtype=jnp.float32, approx_recip=False)
    out_f32 = jax.block_until_ready(out_f32)
    assert jnp.allclose(out_f32, ref, atol=1e-4, rtol=1e-4), (out_f32, ref)

    print("KERNEL_OK")
</pallas_src>

<mosaic_0001>
module attributes {stable_mosaic.version = 11 : i64} {
  func.func @set2set_kernel(%arg0: i32, %arg1: memref<1x16xi32, #tpu.memory_space<vmem>>, %arg2: memref<16x16xbf16, #tpu.memory_space<vmem>>, %arg3: memref<16x16xbf16, #tpu.memory_space<vmem>>, %arg4: memref<48x64xf32, #tpu.memory_space<vmem>>, %arg5: memref<1x64xf32, #tpu.memory_space<vmem>>, %arg6: memref<8x128xf32, #tpu.memory_space<vmem>>) attributes {dimension_semantics = [#tpu.dimension_semantics<parallel>], iteration_bounds = array<i64: 1>, scalar_prefetch = 0 : i64, scratch_operands = 0 : i64, tpu.core_type = #tpu.core_type<tc>, window_params = [{pipeline_mode = #tpu.pipeline_mode<synchronous>, transform_indices = @transform_0, window_bounds = array<i64: 1, 16>}, {pipeline_mode = #tpu.pipeline_mode<synchronous>, transform_indices = @transform_1, window_bounds = array<i64: 16, 16>}, {pipeline_mode = #tpu.pipeline_mode<synchronous>, transform_indices = @transform_2, window_bounds = array<i64: 16, 16>}, {pipeline_mode = #tpu.pipeline_mode<synchronous>, transform_indices = @transform_3, window_bounds = array<i64: 48, 64>}, {pipeline_mode = #tpu.pipeline_mode<synchronous>, transform_indices = @transform_4, window_bounds = array<i64: 1, 64>}, {transform_indices = @transform_5, window_bounds = array<i64: 8, 128>}]} {
    %c0 = arith.constant 0 : index
    %c0_0 = arith.constant 0 : index
    %0 = vector.load %arg2[%c0, %c0_0] : memref<16x16xbf16, #tpu.memory_space<vmem>>, vector<16x16xbf16>
    %c0_1 = arith.constant 0 : index
    %c0_2 = arith.constant 0 : index
    %1 = vector.load %arg3[%c0_1, %c0_2] : memref<16x16xbf16, #tpu.memory_space<vmem>>, vector<16x16xbf16>
    %c0_3 = arith.constant 0 : index
    %c0_4 = arith.constant 0 : index
    %2 = vector.load %arg4[%c0_3, %c0_4] : memref<48x64xf32, #tpu.memory_space<vmem>>, vector<48x64xf32>
    %c0_5 = arith.constant 0 : index
    %c0_6 = arith.constant 0 : index
    %3 = vector.load %arg5[%c0_5, %c0_6] : memref<1x64xf32, #tpu.memory_space<vmem>>, vector<1x64xf32>
    %c8_i32 = arith.constant 8 : i32
    %4 = arith.muli %arg0, %c8_i32 : i32
    %5 = tpu.iota {dimensions = array<i32: 0>} : vector<8x16xi32>
    %6 = vector.broadcast %4 : i32 to vector<8x16xi32>
    %7 = arith.addi %5, %6 : vector<8x16xi32>
    %c0_7 = arith.constant 0 : index
    %c0_8 = arith.constant 0 : index
    %8 = vector.load %arg1[%c0_7, %c0_8] : memref<1x16xi32, #tpu.memory_space<vmem>>, vector<1x16xi32>
    %9 = vector.broadcast %8 : vector<1x16xi32> to vector<8x16xi32>
    %10 = arith.cmpi eq, %9, %7 : vector<8x16xi32>
    %cst = arith.constant 0.000000e+00 : f32
    %cst_9 = arith.constant -1.000000e+30 : f32
    %11 = vector.broadcast %cst : f32 to vector<8x16xf32>
    %12 = vector.broadcast %cst_9 : f32 to vector<8x16xf32>
    %13 = arith.select %10, %11, %12 : vector<8x16xi1>, vector<8x16xf32>
    %cst_10 = arith.constant 0.000000e+00 : f32
    %14 = vector.broadcast %cst_10 : f32 to vector<8x16xf32>
    %cst_11 = arith.constant 0.000000e+00 : f32
    %15 = vector.broadcast %cst_11 : f32 to vector<8x16xf32>
    %cst_12 = arith.constant 0.000000e+00 : f32
    %16 = vector.broadcast %cst_12 : f32 to vector<8x32xf32>
    %17 = tpu.concatenate %16, %14 in 1 : vector<8x32xf32>, vector<8x16xf32> -> vector<8x48xf32>
    %cst_13 = arith.constant dense<0.000000e+00> : vector<8x64xf32>
    %18 = tpu.matmul %17, %2, %cst_13 {dimension_numbers = #tpu.dot_dimension_numbers<[1], [0], [0], [1], [0, 0, 1, 1], [], []>} : vector<8x48xf32>, vector<48x64xf32>, vector<8x64xf32> -> vector<8x64xf32>
    %19 = vector.broadcast %3 : vector<1x64xf32> to vector<8x64xf32>
    %20 = arith.addf %18, %19 : vector<8x64xf32>
    %21 = vector.extract_strided_slice %20 {offsets = [0, 0], sizes = [8, 16], strides = [1, 1]} : vector<8x64xf32> to vector<8x16xf32>
    %22 = arith.negf %21 : vector<8x16xf32>
    %23 = math.exp %22 : vector<8x16xf32>
    %cst_14 = arith.constant 1.000000e+00 : f32
    %24 = vector.broadcast %cst_14 : f32 to vector<8x16xf32>
    %25 = arith.addf %24, %23 : vector<8x16xf32>
    %26 = arith.divf %24, %25 : vector<8x16xf32>
    %27 = vector.extract_strided_slice %20 {offsets = [0, 16], sizes = [8, 16], strides = [1, 1]} : vector<8x64xf32> to vector<8x16xf32>
    %28 = arith.negf %27 : vector<8x16xf32>
    %29 = math.exp %28 : vector<8x16xf32>
    %cst_15 = arith.constant 1.000000e+00 : f32
    %30 = vector.broadcast %cst_15 : f32 to vector<8x16xf32>
    %31 = arith.addf %30, %29 : vector<8x16xf32>
    %32 = arith.divf %30, %31 : vector<8x16xf32>
    %33 = vector.extract_strided_slice %20 {offsets = [0, 32], sizes = [8, 16], strides = [1, 1]} : vector<8x64xf32> to vector<8x16xf32>
    %34 = math.tanh %33 : vector<8x16xf32>
    %35 = vector.extract_strided_slice %20 {offsets = [0, 48], sizes = [8, 16], strides = [1, 1]} : vector<8x64xf32> to vector<8x16xf32>
    %36 = arith.negf %35 : vector<8x16xf32>
    %37 = math.exp %36 : vector<8x16xf32>
    %cst_16 = arith.constant 1.000000e+00 : f32
    %38 = vector.broadcast %cst_16 : f32 to vector<8x16xf32>
    %39 = arith.addf %38, %37 : vector<8x16xf32>
    %40 = arith.divf %38, %39 : vector<8x16xf32>
    %41 = arith.mulf %32, %15 : vector<8x16xf32>
    %42 = arith.mulf %26, %34 : vector<8x16xf32>
    %43 = arith.addf %41, %42 : vector<8x16xf32>
    %44 = math.tanh %43 : vector<8x16xf32>
    %45 = arith.mulf %40, %44 : vector<8x16xf32>
    %46 = arith.truncf %45 : vector<8x16xf32> to vector<8x16xbf16>
    %cst_17 = arith.constant dense<0.000000e+00> : vector<8x16xf32>
    %47 = tpu.matmul %46, %1, %cst_17 {dimension_numbers = #tpu.dot_dimension_numbers<[1], [0], [0], [1], [0, 0, 1, 1], [], []>} : vector<8x16xbf16>, vector<16x16xbf16>, vector<8x16xf32> -> vector<8x16xf32>
    %48 = arith.addf %47, %13 : vector<8x16xf32>
    %cst_18 = arith.constant dense<0xFF800000> : vector<8xf32>
    %49 = vector.multi_reduction <maximumf>, %48, %cst_18 [1] : vector<8x16xf32> to vector<8xf32>
    %50 = vector.shape_cast %49 : vector<8xf32> to vector<8x1xf32>
    %51 = vector.broadcast %50 : vector<8x1xf32> to vector<8x16xf32>
    %52 = arith.subf %48, %51 : vector<8x16xf32>
    %53 = math.exp %52 : vector<8x16xf32>
    %cst_19 = arith.constant dense<0.000000e+00> : vector<8xf32>
    %54 = vector.multi_reduction <add>, %53, %cst_19 [1] : vector<8x16xf32> to vector<8xf32>
    %55 = vector.shape_cast %54 : vector<8xf32> to vector<8x1xf32>
    %cst_20 = arith.constant -1.000000e+29 : f32
    %56 = vector.broadcast %cst_20 : f32 to vector<8x1xf32>
    %57 = arith.cmpf ogt, %50, %56 : vector<8x1xf32>
    %58 = arith.extui %57 : vector<8x1xi1> to vector<8x1xi32>
    %59 = arith.sitofp %58 : vector<8x1xi32> to vector<8x1xf32>
    %cst_21 = arith.constant 1.000000e-16 : f32
    %60 = vector.broadcast %cst_21 : f32 to vector<8x1xf32>
    %61 = arith.addf %55, %60 : vector<8x1xf32>
    %62 = tpu.reciprocal %61 {approx = true} : vector<8x1xf32> -> vector<8x1xf32>
    %63 = arith.mulf %59, %62 : vector<8x1xf32>
    %64 = arith.truncf %53 : vector<8x16xf32> to vector<8x16xbf16>
    %cst_22 = arith.constant dense<0.000000e+00> : vector<8x16xf32>
    %65 = tpu.matmul %64, %0, %cst_22 {dimension_numbers = #tpu.dot_dimension_numbers<[1], [0], [0], [1], [0, 0, 1, 1], [], []>} : vector<8x16xbf16>, vector<16x16xbf16>, vector<8x16xf32> -> vector<8x16xf32>
    %66 = vector.broadcast %63 : vector<8x1xf32> to vector<8x16xf32>
    %67 = arith.mulf %65, %66 : vector<8x16xf32>
    %68 = tpu.concatenate %45, %67 in 1 : vector<8x16xf32>, vector<8x16xf32> -> vector<8x32xf32>
    %69 = tpu.concatenate %68, %45 in 1 : vector<8x32xf32>, vector<8x16xf32> -> vector<8x48xf32>
    %cst_23 = arith.constant dense<0.000000e+00> : vector<8x64xf32>
    %70 = tpu.matmul %69, %2, %cst_23 {dimension_numbers = #tpu.dot_dimension_numbers<[1], [0], [0], [1], [0, 0, 1, 1], [], []>} : vector<8x48xf32>, vector<48x64xf32>, vector<8x64xf32> -> vector<8x64xf32>
    %71 = vector.broadcast %3 : vector<1x64xf32> to vector<8x64xf32>
    %72 = arith.addf %70, %71 : vector<8x64xf32>
    %73 = vector.extract_strided_slice %72 {offsets = [0, 0], sizes = [8, 16], strides = [1, 1]} : vector<8x64xf32> to vector<8x16xf32>
    %74 = arith.negf %73 : vector<8x16xf32>
    %75 = math.exp %74 : vector<8x16xf32>
    %cst_24 = arith.constant 1.000000e+00 : f32
    %76 = vector.broadcast %cst_24 : f32 to vector<8x16xf32>
    %77 = arith.addf %76, %75 : vector<8x16xf32>
    %78 = arith.divf %76, %77 : vector<8x16xf32>
    %79 = vector.extract_strided_slice %72 {offsets = [0, 16], sizes = [8, 16], strides = [1, 1]} : vector<8x64xf32> to vector<8x16xf32>
    %80 = arith.negf %79 : vector<8x16xf32>
    %81 = math.exp %80 : vector<8x16xf32>
    %cst_25 = arith.constant 1.000000e+00 : f32
    %82 = vector.broadcast %cst_25 : f32 to vector<8x16xf32>
    %83 = arith.addf %82, %81 : vector<8x16xf32>
    %84 = arith.divf %82, %83 : vector<8x16xf32>
    %85 = vector.extract_strided_slice %72 {offsets = [0, 32], sizes = [8, 16], strides = [1, 1]} : vector<8x64xf32> to vector<8x16xf32>
    %86 = math.tanh %85 : vector<8x16xf32>
    %87 = vector.extract_strided_slice %72 {offsets = [0, 48], sizes = [8, 16], strides = [1, 1]} : vector<8x64xf32> to vector<8x16xf32>
    %88 = arith.negf %87 : vector<8x16xf32>
    %89 = math.exp %88 : vector<8x16xf32>
    %cst_26 = arith.constant 1.000000e+00 : f32
    %90 = vector.broadcast %cst_26 : f32 to vector<8x16xf32>
    %91 = arith.addf %90, %89 : vector<8x16xf32>
    %92 = arith.divf %90, %91 : vector<8x16xf32>
    %93 = arith.mulf %84, %43 : vector<8x16xf32>
    %94 = arith.mulf %78, %86 : vector<8x16xf32>
    %95 = arith.addf %93, %94 : vector<8x16xf32>
    %96 = math.tanh %95 : vector<8x16xf32>
    %97 = arith.mulf %92, %96 : vector<8x16xf32>
    %98 = arith.truncf %97 : vector<8x16xf32> to vector<8x16xbf16>
    %cst_27 = arith.constant dense<0.000000e+00> : vector<8x16xf32>
    %99 = tpu.matmul %98, %1, %cst_27 {dimension_numbers = #tpu.dot_dimension_numbers<[1], [0], [0], [1], [0, 0, 1, 1], [], []>} : vector<8x16xbf16>, vector<16x16xbf16>, vector<8x16xf32> -> vector<8x16xf32>
    %100 = arith.addf %99, %13 : vector<8x16xf32>
    %cst_28 = arith.constant dense<0xFF800000> : vector<8xf32>
    %101 = vector.multi_reduction <maximumf>, %100, %cst_28 [1] : vector<8x16xf32> to vector<8xf32>
    %102 = vector.shape_cast %101 : vector<8xf32> to vector<8x1xf32>
    %103 = vector.broadcast %102 : vector<8x1xf32> to vector<8x16xf32>
    %104 = arith.subf %100, %103 : vector<8x16xf32>
    %105 = math.exp %104 : vector<8x16xf32>
    %cst_29 = arith.constant dense<0.000000e+00> : vector<8xf32>
    %106 = vector.multi_reduction <add>, %105, %cst_29 [1] : vector<8x16xf32> to vector<8xf32>
    %107 = vector.shape_cast %106 : vector<8xf32> to vector<8x1xf32>
    %cst_30 = arith.constant -1.000000e+29 : f32
    %108 = vector.broadcast %cst_30 : f32 to vector<8x1xf32>
    %109 = arith.cmpf ogt, %102, %108 : vector<8x1xf32>
    %110 = arith.extui %109 : vector<8x1xi1> to vector<8x1xi32>
    %111 = arith.sitofp %110 : vector<8x1xi32> to vector<8x1xf32>
    %cst_31 = arith.constant 1.000000e-16 : f32
    %112 = vector.broadcast %cst_31 : f32 to vector<8x1xf32>
    %113 = arith.addf %107, %112 : vector<8x1xf32>
    %114 = tpu.reciprocal %113 {approx = true} : vector<8x1xf32> -> vector<8x1xf32>
    %115 = arith.mulf %111, %114 : vector<8x1xf32>
    %116 = arith.truncf %105 : vector<8x16xf32> to vector<8x16xbf16>
    %cst_32 = arith.constant dense<0.000000e+00> : vector<8x16xf32>
    %117 = tpu.matmul %116, %0, %cst_32 {dimension_numbers = #tpu.dot_dimension_numbers<[1], [0], [0], [1], [0, 0, 1, 1], [], []>} : vector<8x16xbf16>, vector<16x16xbf16>, vector<8x16xf32> -> vector<8x16xf32>
    %118 = vector.broadcast %115 : vector<8x1xf32> to vector<8x16xf32>
    %119 = arith.mulf %117, %118 : vector<8x16xf32>
    %120 = tpu.concatenate %97, %119 in 1 : vector<8x16xf32>, vector<8x16xf32> -> vector<8x32xf32>
    %121 = tpu.concatenate %120, %97 in 1 : vector<8x32xf32>, vector<8x16xf32> -> vector<8x48xf32>
    %cst_33 = arith.constant dense<0.000000e+00> : vector<8x64xf32>
    %122 = tpu.matmul %121, %2, %cst_33 {dimension_numbers = #tpu.dot_dimension_numbers<[1], [0], [0], [1], [0, 0, 1, 1], [], []>} : vector<8x48xf32>, vector<48x64xf32>, vector<8x64xf32> -> vector<8x64xf32>
    %123 = vector.broadcast %3 : vector<1x64xf32> to vector<8x64xf32>
    %124 = arith.addf %122, %123 : vector<8x64xf32>
    %125 = vector.extract_strided_slice %124 {offsets = [0, 0], sizes = [8, 16], strides = [1, 1]} : vector<8x64xf32> to vector<8x16xf32>
    %126 = arith.negf %125 : vector<8x16xf32>
    %127 = math.exp %126 : vector<8x16xf32>
    %cst_34 = arith.constant 1.000000e+00 : f32
    %128 = vector.broadcast %cst_34 : f32 to vector<8x16xf32>
    %129 = arith.addf %128, %127 : vector<8x16xf32>
    %130 = arith.divf %128, %129 : vector<8x16xf32>
    %131 = vector.extract_strided_slice %124 {offsets = [0, 16], sizes = [8, 16], strides = [1, 1]} : vector<8x64xf32> to vector<8x16xf32>
    %132 = arith.negf %131 : vector<8x16xf32>
    %133 = math.exp %132 : vector<8x16xf32>
    %cst_35 = arith.constant 1.000000e+00 : f32
    %134 = vector.broadcast %cst_35 : f32 to vector<8x16xf32>
    %135 = arith.addf %134, %133 : vector<8x16xf32>
    %136 = arith.divf %134, %135 : vector<8x16xf32>
    %137 = vector.extract_strided_slice %124 {offsets = [0, 32], sizes = [8, 16], strides = [1, 1]} : vector<8x64xf32> to vector<8x16xf32>
    %138 = math.tanh %137 : vector<8x16xf32>
    %139 = vector.extract_strided_slice %124 {offsets = [0, 48], sizes = [8, 16], strides = [1, 1]} : vector<8x64xf32> to vector<8x16xf32>
    %140 = arith.negf %139 : vector<8x16xf32>
    %141 = math.exp %140 : vector<8x16xf32>
    %cst_36 = arith.constant 1.000000e+00 : f32
    %142 = vector.broadcast %cst_36 : f32 to vector<8x16xf32>
    %143 = arith.addf %142, %141 : vector<8x16xf32>
    %144 = arith.divf %142, %143 : vector<8x16xf32>
    %145 = arith.mulf %136, %95 : vector<8x16xf32>
    %146 = arith.mulf %130, %138 : vector<8x16xf32>
    %147 = arith.addf %145, %146 : vector<8x16xf32>
    %148 = math.tanh %147 : vector<8x16xf32>
    %149 = arith.mulf %144, %148 : vector<8x16xf32>
    %150 = arith.truncf %149 : vector<8x16xf32> to vector<8x16xbf16>
    %cst_37 = arith.constant dense<0.000000e+00> : vector<8x16xf32>
    %151 = tpu.matmul %150, %1, %cst_37 {dimension_numbers = #tpu.dot_dimension_numbers<[1], [0], [0], [1], [0, 0, 1, 1], [], []>} : vector<8x16xbf16>, vector<16x16xbf16>, vector<8x16xf32> -> vector<8x16xf32>
    %152 = arith.addf %151, %13 : vector<8x16xf32>
    %cst_38 = arith.constant dense<0xFF800000> : vector<8xf32>
    %153 = vector.multi_reduction <maximumf>, %152, %cst_38 [1] : vector<8x16xf32> to vector<8xf32>
    %154 = vector.shape_cast %153 : vector<8xf32> to vector<8x1xf32>
    %155 = vector.broadcast %154 : vector<8x1xf32> to vector<8x16xf32>
    %156 = arith.subf %152, %155 : vector<8x16xf32>
    %157 = math.exp %156 : vector<8x16xf32>
    %cst_39 = arith.constant dense<0.000000e+00> : vector<8xf32>
    %158 = vector.multi_reduction <add>, %157, %cst_39 [1] : vector<8x16xf32> to vector<8xf32>
    %159 = vector.shape_cast %158 : vector<8xf32> to vector<8x1xf32>
    %cst_40 = arith.constant -1.000000e+29 : f32
    %160 = vector.broadcast %cst_40 : f32 to vector<8x1xf32>
    %161 = arith.cmpf ogt, %154, %160 : vector<8x1xf32>
    %162 = arith.extui %161 : vector<8x1xi1> to vector<8x1xi32>
    %163 = arith.sitofp %162 : vector<8x1xi32> to vector<8x1xf32>
    %cst_41 = arith.constant 1.000000e-16 : f32
    %164 = vector.broadcast %cst_41 : f32 to vector<8x1xf32>
    %165 = arith.addf %159, %164 : vector<8x1xf32>
    %166 = tpu.reciprocal %165 {approx = true} : vector<8x1xf32> -> vector<8x1xf32>
    %167 = arith.mulf %163, %166 : vector<8x1xf32>
    %168 = arith.truncf %157 : vector<8x16xf32> to vector<8x16xbf16>
    %cst_42 = arith.constant dense<0.000000e+00> : vector<8x16xf32>
    %169 = tpu.matmul %168, %0, %cst_42 {dimension_numbers = #tpu.dot_dimension_numbers<[1], [0], [0], [1], [0, 0, 1, 1], [], []>} : vector<8x16xbf16>, vector<16x16xbf16>, vector<8x16xf32> -> vector<8x16xf32>
    %170 = vector.broadcast %167 : vector<8x1xf32> to vector<8x16xf32>
    %171 = arith.mulf %169, %170 : vector<8x16xf32>
    %172 = tpu.concatenate %149, %171 in 1 : vector<8x16xf32>, vector<8x16xf32> -> vector<8x32xf32>
    %cst_43 = arith.constant 0.000000e+00 : f32
    %173 = vector.broadcast %cst_43 : f32 to vector<8x96xf32>
    %174 = tpu.concatenate %172, %173 in 1 : vector<8x32xf32>, vector<8x96xf32> -> vector<8x128xf32>
    %c0_44 = arith.constant 0 : index
    %c0_45 = arith.constant 0 : index
    %175 = vector.load %arg6[%c0_44, %c0_45] : memref<8x128xf32, #tpu.memory_space<vmem>>, vector<8x128xf32>
    tpu.vector_store %arg6[%c0_44, %c0_45], %174 {strides = array<i32>} : memref<8x128xf32, #tpu.memory_space<vmem>>, vector<8x128xf32>,
    return
  }
  func.func @transform_0(%arg0: i32) -> (i32, i32) {
    %c0_i32 = arith.constant 0 : i32
    %c0_i32_0 = arith.constant 0 : i32
    %c0_i32_1 = arith.constant 0 : i32
    return %c0_i32, %c0_i32_0 : i32, i32
  }
  func.func @transform_1(%arg0: i32) -> (i32, i32) {
    %c0_i32 = arith.constant 0 : i32
    %c0_i32_0 = arith.constant 0 : i32
    %c0_i32_1 = arith.constant 0 : i32
    return %c0_i32, %c0_i32_0 : i32, i32
  }
  func.func @transform_2(%arg0: i32) -> (i32, i32) {
    %c0_i32 = arith.constant 0 : i32
    %c0_i32_0 = arith.constant 0 : i32
    %c0_i32_1 = arith.constant 0 : i32
    return %c0_i32, %c0_i32_0 : i32, i32
  }
  func.func @transform_3(%arg0: i32) -> (i32, i32) {
    %c0_i32 = arith.constant 0 : i32
    %c0_i32_0 = arith.constant 0 : i32
    %c0_i32_1 = arith.constant 0 : i32
    return %c0_i32, %c0_i32_0 : i32, i32
  }
  func.func @transform_4(%arg0: i32) -> (i32, i32) {
    %c0_i32 = arith.constant 0 : i32
    %c0_i32_0 = arith.constant 0 : i32
    %c0_i32_1 = arith.constant 0 : i32
    return %c0_i32, %c0_i32_0 : i32, i32
  }
  func.func @transform_5(%arg0: i32) -> (i32, i32) {
    %c0_i32 = arith.constant 0 : i32
    %c0_i32_0 = arith.constant 0 : i32
    return %arg0, %c0_i32 : i32, i32
  }
}

</mosaic_0001>

<llo_original>
// kernel: tpu_custom_call.1
$region0: #{tpu_custom_call.1}
  #allocation0 [shape = 'u32[]', space=smem, size = 0x4, offset = 0x4, fixed_abs, tag = 'smem constant byte address 0x4 - core index']
  #allocation1 [shape = 'u32[144,128]{1,0:T(1,128)}', space=vmem, size = 0x12000, scoped, tag = 'internal scratch']
  %s0 = inlined_call_operand.hbm [shape: s32[1,16], index: 0, kind: input, shape index: {}]
  %s1 = inlined_call_operand.hbm [shape: bf16[16,16], index: 1, kind: input, shape index: {}]
  %s2 = inlined_call_operand.hbm [shape: bf16[16,16], index: 2, kind: input, shape index: {}]
  %s3 = inlined_call_operand.hbm [shape: f32[48,64], index: 3, kind: input, shape index: {}]
  %s4 = inlined_call_operand.hbm [shape: f32[1,64], index: 4, kind: input, shape index: {}]
  %s5 = inlined_call_operand.hbm [shape: f32[8,128], index: 5, kind: output, shape index: {}]
  %s6 = sld [smem:[#allocation0]]
  $region50: #{tpu_custom_call.1} parent=0
    _
  %s8 = ssub.s32 1, %s6
  %s9 = scalar_select 0, %s8, %s6
  $region1: #{tpu_custom_call.1} parent=0
    #allocation2 [shape = 'u8[512]{0}', space=vmem, size = 0x400, scoped, tag = 'input window, operand 0, single buffered']
    #allocation3 [shape = 's32[1]{0}', space=sflag, size = 0x4, scoped, tag = 'scoped memory for tpu_custom_call.1']
    #allocation4 [shape = 's32[1]{0}', space=sflag, size = 0x4, scoped, tag = 'scoped memory for tpu_custom_call.1']
    #allocation5 [shape = 'u8[4096]{0}', space=vmem, size = 0x1000, scoped, tag = 'input window, operand 1, single buffered']
    #allocation6 [shape = 's32[1]{0}', space=sflag, size = 0x4, scoped, tag = 'scoped memory for tpu_custom_call.1']
    #allocation7 [shape = 'u8[4096]{0}', space=vmem, size = 0x1000, scoped, tag = 'input window, operand 2, single buffered']
    #allocation8 [shape = 'u8[24576]{0}', space=vmem, size = 0x6000, scoped, tag = 'input window, operand 3, single buffered']
    #allocation9 [shape = 's32[1]{0}', space=sflag, size = 0x4, scoped, tag = 'scoped memory for tpu_custom_call.1']
    #allocation10 [shape = 'u8[512]{0}', space=vmem, size = 0x400, scoped, tag = 'input window, operand 4, single buffered']
    #allocation11 [shape = 'u8[4096]{0}', space=vmem, size = 0x1000, scoped, tag = 'output window, operand 0, single buffered']
    %10 = vsyncpa [#allocation3], 0
    %11 = vsyncpa [#allocation6], 0
    %12 = vsyncpa [#allocation9], 0
    %13 = vsyncpa [#allocation4], 0
    // Predicated region
    $region2: #{tpu_custom_call.1} parent=1 // pred_check
      _
    $region3: #{tpu_custom_call.1} parent=1 // pred_check_branch
      %15 = sbr.rel (0) target = $region5
    $region4: #{tpu_custom_call.1} parent=1 // pred_region
      %s17 = ssub.s32 16, 16
      %18 = vsyncadd [#allocation3], %s17
      %s20 = sshll.u32 [#allocation2], 4
      %s21 = int_to_ptr.vmem [resolvable:$true] %s20
      %23 = dma.hbm_to_vmem [thread:$0]  %s0, 16, %s21, [#allocation3]
    $region5: #{tpu_custom_call.1} parent=1 // pred_fallthru
      _
    // Predicated region
    $region6: #{tpu_custom_call.1} parent=1 // pred_check
      _
    $region7: #{tpu_custom_call.1} parent=1 // pred_check_branch
      %25 = sbr.rel (0) target = $region9
    $region8: #{tpu_custom_call.1} parent=1 // pred_region
      %s27 = ssub.s32 128, 128
      %28 = vsyncadd [#allocation6], %s27
      %s29 = sshll.u32 [#allocation5], 4
      %s30 = int_to_ptr.vmem [resolvable:$true] %s29
      %35 = dma.hbm_to_vmem [thread:$0]  %s1, 128, %s30, [#allocation6], 64, 64, 4
    $region9: #{tpu_custom_call.1} parent=1 // pred_fallthru
      _
    // Predicated region
    $region10: #{tpu_custom_call.1} parent=1 // pred_check
      _
    $region11: #{tpu_custom_call.1} parent=1 // pred_check_branch
      %37 = sbr.rel (0) target = $region13
    $region12: #{tpu_custom_call.1} parent=1 // pred_region
      %s39 = ssub.s32 128, 128
      %40 = vsyncadd [#allocation6], %s39
      %s41 = sshll.u32 [#allocation7], 4
      %s42 = int_to_ptr.vmem [resolvable:$true] %s41
      %47 = dma.hbm_to_vmem [thread:$0]  %s2, 128, %s42, [#allocation6], 64, 64, 4
    $region13: #{tpu_custom_call.1} parent=1 // pred_fallthru
      _
    // Predicated region
    $region14: #{tpu_custom_call.1} parent=1 // pred_check
      _
    $region15: #{tpu_custom_call.1} parent=1 // pred_check_branch
      %49 = sbr.rel (0) target = $region17
    $region16: #{tpu_custom_call.1} parent=1 // pred_region
      %s51 = ssub.s32 768, 768
      %52 = vsyncadd [#allocation9], %s51
      %s53 = sshll.u32 [#allocation8], 4
      %s54 = int_to_ptr.vmem [resolvable:$true] %s53
      %59 = dma.hbm_to_vmem [thread:$0]  %s3, 768, %s54, [#allocation9], 128, 128, 8
    $region17: #{tpu_custom_call.1} parent=1 // pred_fallthru
      _
    // Predicated region
    $region18: #{tpu_custom_call.1} parent=1 // pred_check
      _
    $region19: #{tpu_custom_call.1} parent=1 // pred_check_branch
      %61 = sbr.rel (0) target = $region21
    $region20: #{tpu_custom_call.1} parent=1 // pred_region
      %s63 = ssub.s32 16, 16
      %64 = vsyncadd [#allocation9], %s63
      %s66 = sshll.u32 [#allocation10], 4
      %s67 = int_to_ptr.vmem [resolvable:$true] %s66
      %69 = dma.hbm_to_vmem [thread:$0]  %s4, 16, %s67, [#allocation9]
    $region21: #{tpu_custom_call.1} parent=1 // pred_fallthru
      _
    // Predicated region
    $region22: #{tpu_custom_call.1} parent=1 // pred_check
      _
    $region23: #{tpu_custom_call.1} parent=1 // pred_check_branch
      %71 = sbr.rel (0) target = $region25
    $region24: #{tpu_custom_call.1} parent=1 // pred_region
      %72 = dma.done [#allocation3], 16
    $region25: #{tpu_custom_call.1} parent=1 // pred_fallthru
      _
    // Predicated region
    $region26: #{tpu_custom_call.1} parent=1 // pred_check
      _
    $region27: #{tpu_custom_call.1} parent=1 // pred_check_branch
      %74 = sbr.rel (0) target = $region29
    $region28: #{tpu_custom_call.1} parent=1 // pred_region
      %75 = dma.done [#allocation6], 128
    $region29: #{tpu_custom_call.1} parent=1 // pred_fallthru
      _
    // Predicated region
    $region30: #{tpu_custom_call.1} parent=1 // pred_check
      _
    $region31: #{tpu_custom_call.1} parent=1 // pred_check_branch
      %77 = sbr.rel (0) target = $region33
    $region32: #{tpu_custom_call.1} parent=1 // pred_region
      %78 = dma.done [#allocation6], 128
    $region33: #{tpu_custom_call.1} parent=1 // pred_fallthru
      _
    // Predicated region
    $region34: #{tpu_custom_call.1} parent=1 // pred_check
      _
    $region35: #{tpu_custom_call.1} parent=1 // pred_check_branch
      %80 = sbr.rel (0) target = $region37
    $region36: #{tpu_custom_call.1} parent=1 // pred_region
      %81 = dma.done [#allocation9], 768
    $region37: #{tpu_custom_call.1} parent=1 // pred_fallthru
      _
    // Predicated region
    $region38: #{tpu_custom_call.1} parent=1 // pred_check
      _
    $region39: #{tpu_custom_call.1} parent=1 // pred_check_branch
      %83 = sbr.rel (0) target = $region41
    $region40: #{tpu_custom_call.1} parent=1 // pred_region
      %84 = dma.done [#allocation9], 16
    $region41: #{tpu_custom_call.1} parent=1 // pred_fallthru
      _
    %v86 = vld [vmem:[#allocation5] sm:$0xf]
    %v87 = vld [vmem:[#allocation5 + $0x4] sm:$0xf]
    %v88 = vld [vmem:[#allocation7] sm:$0xf]
    %v89 = vld [vmem:[#allocation7 + $0x4] sm:$0xf]
    %v90 = vld [vmem:[#allocation8] sm:$0xff]
    %v91 = vld [vmem:[#allocation8 + $0x8] sm:$0xff]
    %v92 = vld [vmem:[#allocation8 + $0x10] sm:$0xff]
    %v93 = vld [vmem:[#allocation8 + $0x18] sm:$0xff]
    %v94 = vld [vmem:[#allocation8 + $0x20] sm:$0xff]
    %v95 = vld [vmem:[#allocation8 + $0x28] sm:$0xff]
    %v96 = vld [vmem:[#allocation10] sm:$0x1]
    %s97 = smul.u32 0, 8
    %v98 = vlaneseq
    %v99 = vshrl.u32 %v98, 7
    %v100 = vstv %s97
    %v101 = vadd.s32 %v99, %v100
    %v102 = vld [vmem:[#allocation2] sm:$0x1]
    %v103 = vlaneseq
    %v104 = vshrl.u32 %v103, 7
    %v105 = vsub.s32 0, %v104
    %v106 = vrot.slane %v102, %v105
    %vm107 = vcmp.eq.s32.totalorder %v106, %v101
    %v108 = vsel %vm107, 0.0, -1e+30
    %v110 = vlaneseq
    %v111 = vshrl.u32 %v110, 7
    %v112 = vsub.s32 0, %v111
    %v113 = vrot.slane %v96, %v112
    %vm115 = vcmask 392192
    %v117 = vsel %vm115, 0.0, 0
    %119 = vmatprep.subr.mxu0 0.0
    %120 = vmatpush1.msra.mxu0 %v90
    %121 = vmatprep.subr.mxu0 0.0
    %122 = vmatpush1.msra.mxu0 %v91
    %123 = vmatprep.subr.mxu0 0.0
    %124 = vmatpush1.msra.mxu0 %v92
    %125 = vmatprep.subr.mxu0 0.0
    %126 = vmatpush1.msra.mxu0 %v93
    %127 = vmatprep.subr.mxu0 0.0
    %128 = vmatpush1.msra.mxu0 %v94
    %129 = vmatprep.subr.mxu0 0.0
    %130 = vmatpush1.msra.mxu0 %v95
    %131 = vmatprep.subr.mxu0 0.0
    %132 = vmatpush1.msra.mxu0 0.0
    %133 = vmatprep.subr.mxu0 0.0
    %134 = vmatpush1.msra.mxu0 0.0
    %135 = vmatprep.subr.mxu0 0.0
    %136 = vmatpush1.msra.mxu0 0.0
    %137 = vmatprep.subr.mxu0 0.0
    %138 = vmatpush1.msra.mxu0 0.0
    %139 = vmatprep.subr.mxu0 0.0
    %140 = vmatpush1.msra.mxu0 0.0
    %141 = vmatprep.subr.mxu0 0.0
    %142 = vmatpush1.msra.mxu0 0.0
    %143 = vmatprep.subr.mxu0 0.0
    %144 = vmatpush1.msra.mxu0 0.0
    %145 = vmatprep.subr.mxu0 0.0
    %146 = vmatpush1.msra.mxu0 0.0
    %147 = vmatprep.subr.mxu0 0.0
    %148 = vmatpush1.msra.mxu0 0.0
    %149 = vmatprep.subr.mxu0 0.0
    %150 = vmatpush1.msra.mxu0 0.0
    %151 = vmatprep.subr.mxu0 0.0
    %152 = vmatpush1.msra.mxu0 0.0
    %153 = vmatprep.subr.mxu0 0.0
    %154 = vmatpush1.msra.mxu0 0.0
    %155 = vmatprep.subr.mxu0 0.0
    %156 = vmatpush1.msra.mxu0 0.0
    %157 = vmatprep.subr.mxu0 0.0
    %158 = vmatpush1.msra.mxu0 0.0
    %159 = vmatprep.subr.mxu0 0.0
    %160 = vmatpush1.msra.mxu0 0.0
    %161 = vmatprep.subr.mxu0 0.0
    %162 = vmatpush1.msra.mxu0 0.0
    %163 = vmatprep.subr.mxu0 0.0
    %164 = vmatpush1.msra.mxu0 0.0
    %165 = vmatprep.subr.mxu0 0.0
    %166 = vmatpush1.msra.mxu0 0.0
    %167 = vmatprep.subr.mxu0 0.0
    %168 = vmatpush1.msra.mxu0 0.0
    %169 = vmatprep.subr.mxu0 0.0
    %170 = vmatpush1.msra.mxu0 0.0
    %171 = vmatprep.subr.mxu0 0.0
    %172 = vmatpush1.msra.mxu0 0.0
    %173 = vmatprep.subr.mxu0 0.0
    %174 = vmatpush1.msra.mxu0 0.0
    %175 = vmatprep.subr.mxu0 0.0
    %176 = vmatpush1.msra.mxu0 0.0
    %177 = vmatprep.subr.mxu0 0.0
    %178 = vmatpush1.msra.mxu0 0.0
    %179 = vmatprep.subr.mxu0 0.0
    %180 = vmatpush1.msra.mxu0 0.0
    %181 = vmatprep.subr.mxu0 0.0
    %182 = vmatpush1.msra.mxu0 0.0
    %183 = vmatprep.mubr.f32.mxu0 0.0
    %184 = vmatmul.mubr.f32.gmra.mrb[0].mxu0 %v117
    %v185 = vpop.f32.mrb[0].mxu0
    %v186 = vadd.f32 %v113, %v185
    %v187 = vpop.f32.mrb[0].mxu0
    %188 = vdwg.mxu0
    %v189 = vxor.u32 %v186, 2147483648
    %v190 = vmul.f32 %v189, 1.442695
    %v191 = vpow.pop %v190
    %v192 = vadd.f32 %v191, 1.0
    %v193 = vrcp.pop %v192
    %v194 = vmul.f32 1.0, %v193
    %v195 = vtanh.pop %v186
    %v196 = vmul.f32 %v194, 0.0
    %198 = vrot.lane.b32.xlu0 %v195, 96
    %v199 = vpop.permute.xlu0 %198
    %v201 = vmul.f32 %v194, %v199
    %203 = vrot.lane.b32.xlu0 %v201, 16
    %v204 = vpop.permute.xlu0 %203
    %v206 = vadd.f32 %v196, %v204
    %v207 = vtanh.pop %v206
    %209 = vrot.lane.b32.xlu0 %v207, 32
    %v210 = vpop.permute.xlu0 %209
    %v212 = vmul.f32 %v194, %v210
    %v213 = vpack.c.bf16 %v212, %v212
    %215 = vrot.lane.b32.xlu0 %v213, 80
    %v216 = vpop.permute.xlu0 %215
    %v219 = vunpack.c.l.b16 %v88
    %v220 = vunpack.c.l.b16 %v89
    %v221 = vpack.c.b16 %v220, %v219
    %vm223 = vcmask 130048
    %v225 = vsel %vm223, %v216, 0
    %227 = vmatprep.subr.bf16.mxu0 0
    %228 = vmatpush1.bf16.msra.mxu0 %v221
    %229 = vmatprep.subr.bf16.mxu0 0
    %230 = vmatpush1.bf16.msra.mxu0 0
    %231 = vmatprep.subr.bf16.mxu0 0
    %232 = vmatpush1.bf16.msra.mxu0 0
    %233 = vmatprep.subr.bf16.mxu0 0
    %234 = vmatpush1.bf16.msra.mxu0 0
    %235 = vmatprep.subr.bf16.mxu0 0
    %236 = vmatpush1.bf16.msra.mxu0 0
    %237 = vmatprep.subr.bf16.mxu0 0
    %238 = vmatpush1.bf16.msra.mxu0 0
    %239 = vmatprep.subr.bf16.mxu0 0
    %240 = vmatpush1.bf16.msra.mxu0 0
    %241 = vmatprep.subr.bf16.mxu0 0
    %242 = vmatpush1.bf16.msra.mxu0 0
    %243 = vmatprep.subr.bf16.mxu0 0
    %244 = vmatpush1.bf16.msra.mxu0 0
    %245 = vmatprep.subr.bf16.mxu0 0
    %246 = vmatpush1.bf16.msra.mxu0 0
    %247 = vmatprep.subr.bf16.mxu0 0
    %248 = vmatpush1.bf16.msra.mxu0 0
    %249 = vmatprep.subr.bf16.mxu0 0
    %250 = vmatpush1.bf16.msra.mxu0 0
    %251 = vmatprep.subr.bf16.mxu0 0
    %252 = vmatpush1.bf16.msra.mxu0 0
    %253 = vmatprep.subr.bf16.mxu0 0
    %254 = vmatpush1.bf16.msra.mxu0 0
    %255 = vmatprep.subr.bf16.mxu0 0
    %256 = vmatpush1.bf16.msra.mxu0 0
    %257 = vmatprep.subr.bf16.mxu0 0
    %258 = vmatpush1.bf16.msra.mxu0 0
    %259 = vmatprep.mubr.bf16.mxu0 0
    %260 = vmatmul.mubr.bf16.gmra.mrb[0].mxu0 %v225
    %v261 = vpop.f32.mrb[0].mxu0
    %v262 = vadd.f32 %v108, %v261
    %v263 = vpop.f32.mrb[0].mxu0
    %v264 = vpop.f32.mrb[0].mxu0
    %v265 = vpop.f32.mrb[0].mxu0
    %266 = vdwg.mxu0
    %v267 = vsel %vm223, %v262, -inf
    %268 = vmax.xlane.f32.xlu0 %v267
    %v269 = vpop.xlane.xlu0 %268
    %v270 = vsub.f32 %v262, %v269
    %v271 = vmul.f32 %v270, 1.442695
    %v272 = vpow.pop %v271
    %v273 = vsel %vm223, %v272, 0.0
    %274 = vadd.xlane.f32.xlu0 %v273
    %v275 = vpop.xlane.xlu0 %274
    %vm276 = vcmp.gt.f32.partialorder %v269, -1e+29
    %v277 = vsel %vm276, 1, 0
    %v278 = vcvt.s32.f32 %v277
    %v279 = vadd.f32 %v275, 1e-16
    %v280 = vrcp.pop %v279
    %v281 = vmul.f32 %v278, %v280
    %v282 = vpack.c.bf16 %v272, %v272
    %v285 = vunpack.c.l.b16 %v86
    %v286 = vunpack.c.l.b16 %v87
    %v287 = vpack.c.b16 %v286, %v285
    %v290 = vsel %vm223, %v282, 0
    %292 = vmatprep.subr.bf16.mxu0 0
    %293 = vmatpush1.bf16.msra.mxu0 %v287
    %294 = vmatprep.subr.bf16.mxu0 0
    %295 = vmatpush1.bf16.msra.mxu0 0
    %296 = vmatprep.subr.bf16.mxu0 0
    %297 = vmatpush1.bf16.msra.mxu0 0
    %298 = vmatprep.subr.bf16.mxu0 0
    %299 = vmatpush1.bf16.msra.mxu0 0
    %300 = vmatprep.subr.bf16.mxu0 0
    %301 = vmatpush1.bf16.msra.mxu0 0
    %302 = vmatprep.subr.bf16.mxu0 0
    %303 = vmatpush1.bf16.msra.mxu0 0
    %304 = vmatprep.subr.bf16.mxu0 0
    %305 = vmatpush1.bf16.msra.mxu0 0
    %306 = vmatprep.subr.bf16.mxu0 0
    %307 = vmatpush1.bf16.msra.mxu0 0
    %308 = vmatprep.subr.bf16.mxu0 0
    %309 = vmatpush1.bf16.msra.mxu0 0
    %310 = vmatprep.subr.bf16.mxu0 0
    %311 = vmatpush1.bf16.msra.mxu0 0
    %312 = vmatprep.subr.bf16.mxu0 0
    %313 = vmatpush1.bf16.msra.mxu0 0
    %314 = vmatprep.subr.bf16.mxu0 0
    %315 = vmatpush1.bf16.msra.mxu0 0
    %316 = vmatprep.subr.bf16.mxu0 0
    %317 = vmatpush1.bf16.msra.mxu0 0
    %318 = vmatprep.subr.bf16.mxu0 0
    %319 = vmatpush1.bf16.msra.mxu0 0
    %320 = vmatprep.subr.bf16.mxu0 0
    %321 = vmatpush1.bf16.msra.mxu0 0
    %322 = vmatprep.subr.bf16.mxu0 0
    %323 = vmatpush1.bf16.msra.mxu0 0
    %324 = vmatprep.mubr.bf16.mxu0 0
    %325 = vmatmul.mubr.bf16.gmra.mrb[0].mxu0 %v290
    %v326 = vpop.f32.mrb[0].mxu0
    %v327 = vadd.f32 0.0, %v326
    %v328 = vpop.f32.mrb[0].mxu0
    %v329 = vpop.f32.mrb[0].mxu0
    %v330 = vpop.f32.mrb[0].mxu0
    %331 = vdwg.mxu0
    %v332 = vmul.f32 %v327, %v281
    %334 = vrot.lane.b32.xlu0 %v212, 80
    %v335 = vpop.permute.xlu0 %334
    %338 = vrot.lane.b32.xlu0 %v332, 16
    %v339 = vpop.permute.xlu0 %338
    %v341 = vsel %vm223, %v335, %v339
    %342 = vrot.lane.b32.xlu0 %v212, 112
    %v343 = vpop.permute.xlu0 %342
    %vm345 = vcmask 261120
    %v346 = vsel %vm345, %v341, %v343
    %v348 = vsel %vm115, %v346, 0
    %350 = vmatprep.subr.mxu0 0.0
    %351 = vmatpush1.msra.mxu0 %v90
    %352 = vmatprep.subr.mxu0 0.0
    %353 = vmatpush1.msra.mxu0 %v91
    %354 = vmatprep.subr.mxu0 0.0
    %355 = vmatpush1.msra.mxu0 %v92
    %356 = vmatprep.subr.mxu0 0.0
    %357 = vmatpush1.msra.mxu0 %v93
    %358 = vmatprep.subr.mxu0 0.0
    %359 = vmatpush1.msra.mxu0 %v94
    %360 = vmatprep.subr.mxu0 0.0
    %361 = vmatpush1.msra.mxu0 %v95
    %362 = vmatprep.subr.mxu0 0.0
    %363 = vmatpush1.msra.mxu0 0.0
    %364 = vmatprep.subr.mxu0 0.0
    %365 = vmatpush1.msra.mxu0 0.0
    %366 = vmatprep.subr.mxu0 0.0
    %367 = vmatpush1.msra.mxu0 0.0
    %368 = vmatprep.subr.mxu0 0.0
    %369 = vmatpush1.msra.mxu0 0.0
    %370 = vmatprep.subr.mxu0 0.0
    %371 = vmatpush1.msra.mxu0 0.0
    %372 = vmatprep.subr.mxu0 0.0
    %373 = vmatpush1.msra.mxu0 0.0
    %374 = vmatprep.subr.mxu0 0.0
    %375 = vmatpush1.msra.mxu0 0.0
    %376 = vmatprep.subr.mxu0 0.0
    %377 = vmatpush1.msra.mxu0 0.0
    %378 = vmatprep.subr.mxu0 0.0
    %379 = vmatpush1.msra.mxu0 0.0
    %380 = vmatprep.subr.mxu0 0.0
    %381 = vmatpush1.msra.mxu0 0.0
    %382 = vmatprep.subr.mxu0 0.0
    %383 = vmatpush1.msra.mxu0 0.0
    %384 = vmatprep.subr.mxu0 0.0
    %385 = vmatpush1.msra.mxu0 0.0
    %386 = vmatprep.subr.mxu0 0.0
    %387 = vmatpush1.msra.mxu0 0.0
    %388 = vmatprep.subr.mxu0 0.0
    %389 = vmatpush1.msra.mxu0 0.0
    %390 = vmatprep.subr.mxu0 0.0
    %391 = vmatpush1.msra.mxu0 0.0
    %392 = vmatprep.subr.mxu0 0.0
    %393 = vmatpush1.msra.mxu0 0.0
    %394 = vmatprep.subr.mxu0 0.0
    %395 = vmatpush1.msra.mxu0 0.0
    %396 = vmatprep.subr.mxu0 0.0
    %397 = vmatpush1.msra.mxu0 0.0
    %398 = vmatprep.subr.mxu0 0.0
    %399 = vmatpush1.msra.mxu0 0.0
    %400 = vmatprep.subr.mxu0 0.0
    %401 = vmatpush1.msra.mxu0 0.0
    %402 = vmatprep.subr.mxu0 0.0
    %403 = vmatpush1.msra.mxu0 0.0
    %404 = vmatprep.subr.mxu0 0.0
    %405 = vmatpush1.msra.mxu0 0.0
    %406 = vmatprep.subr.mxu0 0.0
    %407 = vmatpush1.msra.mxu0 0.0
    %408 = vmatprep.subr.mxu0 0.0
    %409 = vmatpush1.msra.mxu0 0.0
    %410 = vmatprep.subr.mxu0 0.0
    %411 = vmatpush1.msra.mxu0 0.0
    %412 = vmatprep.subr.mxu0 0.0
    %413 = vmatpush1.msra.mxu0 0.0
    %414 = vmatprep.mubr.f32.mxu0 0.0
    %415 = vmatmul.mubr.f32.gmra.mrb[0].mxu0 %v348
    %v416 = vpop.f32.mrb[0].mxu0
    %v417 = vadd.f32 %v113, %v416
    %v418 = vpop.f32.mrb[0].mxu0
    %419 = vdwg.mxu0
    %v420 = vxor.u32 %v417, 2147483648
    %v421 = vmul.f32 %v420, 1.442695
    %v422 = vpow.pop %v421
    %v423 = vadd.f32 %v422, 1.0
    %v424 = vrcp.pop %v423
    %v425 = vmul.f32 1.0, %v424
    %v426 = vtanh.pop %v417
    %v427 = vmul.f32 %v425, %v206
    %429 = vrot.lane.b32.xlu0 %v426, 96
    %v430 = vpop.permute.xlu0 %429
    %v432 = vmul.f32 %v425, %v430
    %434 = vrot.lane.b32.xlu0 %v432, 16
    %v435 = vpop.permute.xlu0 %434
    %v437 = vadd.f32 %v427, %v435
    %v438 = vtanh.pop %v437
    %440 = vrot.lane.b32.xlu0 %v438, 32
    %v441 = vpop.permute.xlu0 %440
    %v443 = vmul.f32 %v425, %v441
    %v444 = vpack.c.bf16 %v443, %v443
    %446 = vrot.lane.b32.xlu0 %v444, 80
    %v447 = vpop.permute.xlu0 %446
    %v449 = vsel %vm223, %v447, 0
    %451 = vmatprep.subr.bf16.mxu0 0
    %452 = vmatpush1.bf16.msra.mxu0 %v221
    %453 = vmatprep.subr.bf16.mxu0 0
    %454 = vmatpush1.bf16.msra.mxu0 0
    %455 = vmatprep.subr.bf16.mxu0 0
    %456 = vmatpush1.bf16.msra.mxu0 0
    %457 = vmatprep.subr.bf16.mxu0 0
    %458 = vmatpush1.bf16.msra.mxu0 0
    %459 = vmatprep.subr.bf16.mxu0 0
    %460 = vmatpush1.bf16.msra.mxu0 0
    %461 = vmatprep.subr.bf16.mxu0 0
    %462 = vmatpush1.bf16.msra.mxu0 0
    %463 = vmatprep.subr.bf16.mxu0 0
    %464 = vmatpush1.bf16.msra.mxu0 0
    %465 = vmatprep.subr.bf16.mxu0 0
    %466 = vmatpush1.bf16.msra.mxu0 0
    %467 = vmatprep.subr.bf16.mxu0 0
    %468 = vmatpush1.bf16.msra.mxu0 0
    %469 = vmatprep.subr.bf16.mxu0 0
    %470 = vmatpush1.bf16.msra.mxu0 0
    %471 = vmatprep.subr.bf16.mxu0 0
    %472 = vmatpush1.bf16.msra.mxu0 0
    %473 = vmatprep.subr.bf16.mxu0 0
    %474 = vmatpush1.bf16.msra.mxu0 0
    %475 = vmatprep.subr.bf16.mxu0 0
    %476 = vmatpush1.bf16.msra.mxu0 0
    %477 = vmatprep.subr.bf16.mxu0 0
    %478 = vmatpush1.bf16.msra.mxu0 0
    %479 = vmatprep.subr.bf16.mxu0 0
    %480 = vmatpush1.bf16.msra.mxu0 0
    %481 = vmatprep.subr.bf16.mxu0 0
    %482 = vmatpush1.bf16.msra.mxu0 0
    %483 = vmatprep.mubr.bf16.mxu0 0
    %484 = vmatmul.mubr.bf16.gmra.mrb[0].mxu0 %v449
    %v485 = vpop.f32.mrb[0].mxu0
    %v486 = vadd.f32 %v108, %v485
    %v487 = vpop.f32.mrb[0].mxu0
    %v488 = vpop.f32.mrb[0].mxu0
    %v489 = vpop.f32.mrb[0].mxu0
    %490 = vdwg.mxu0
    %v491 = vsel %vm223, %v486, -inf
    %492 = vmax.xlane.f32.xlu0 %v491
    %v493 = vpop.xlane.xlu0 %492
    %v494 = vsub.f32 %v486, %v493
    %v495 = vmul.f32 %v494, 1.442695
    %v496 = vpow.pop %v495
    %v497 = vsel %vm223, %v496, 0.0
    %498 = vadd.xlane.f32.xlu0 %v497
    %v499 = vpop.xlane.xlu0 %498
    %vm500 = vcmp.gt.f32.partialorder %v493, -1e+29
    %v501 = vsel %vm500, 1, 0
    %v502 = vcvt.s32.f32 %v501
    %v503 = vadd.f32 %v499, 1e-16
    %v504 = vrcp.pop %v503
    %v505 = vmul.f32 %v502, %v504
    %v506 = vpack.c.bf16 %v496, %v496
    %v508 = vsel %vm223, %v506, 0
    %510 = vmatprep.subr.bf16.mxu0 0
    %511 = vmatpush1.bf16.msra.mxu0 %v287
    %512 = vmatprep.subr.bf16.mxu0 0
    %513 = vmatpush1.bf16.msra.mxu0 0
    %514 = vmatprep.subr.bf16.mxu0 0
    %515 = vmatpush1.bf16.msra.mxu0 0
    %516 = vmatprep.subr.bf16.mxu0 0
    %517 = vmatpush1.bf16.msra.mxu0 0
    %518 = vmatprep.subr.bf16.mxu0 0
    %519 = vmatpush1.bf16.msra.mxu0 0
    %520 = vmatprep.subr.bf16.mxu0 0
    %521 = vmatpush1.bf16.msra.mxu0 0
    %522 = vmatprep.subr.bf16.mxu0 0
    %523 = vmatpush1.bf16.msra.mxu0 0
    %524 = vmatprep.subr.bf16.mxu0 0
    %525 = vmatpush1.bf16.msra.mxu0 0
    %526 = vmatprep.subr.bf16.mxu0 0
    %527 = vmatpush1.bf16.msra.mxu0 0
    %528 = vmatprep.subr.bf16.mxu0 0
    %529 = vmatpush1.bf16.msra.mxu0 0
    %530 = vmatprep.subr.bf16.mxu0 0
    %531 = vmatpush1.bf16.msra.mxu0 0
    %532 = vmatprep.subr.bf16.mxu0 0
    %533 = vmatpush1.bf16.msra.mxu0 0
    %534 = vmatprep.subr.bf16.mxu0 0
    %535 = vmatpush1.bf16.msra.mxu0 0
    %536 = vmatprep.subr.bf16.mxu0 0
    %537 = vmatpush1.bf16.msra.mxu0 0
    %538 = vmatprep.subr.bf16.mxu0 0
    %539 = vmatpush1.bf16.msra.mxu0 0
    %540 = vmatprep.subr.bf16.mxu0 0
    %541 = vmatpush1.bf16.msra.mxu0 0
    %542 = vmatprep.mubr.bf16.mxu0 0
    %543 = vmatmul.mubr.bf16.gmra.mrb[0].mxu0 %v508
    %v544 = vpop.f32.mrb[0].mxu0
    %v545 = vadd.f32 0.0, %v544
    %v546 = vpop.f32.mrb[0].mxu0
    %v547 = vpop.f32.mrb[0].mxu0
    %v548 = vpop.f32.mrb[0].mxu0
    %549 = vdwg.mxu0
    %v550 = vmul.f32 %v545, %v505
    %552 = vrot.lane.b32.xlu0 %v443, 80
    %v553 = vpop.permute.xlu0 %552
    %556 = vrot.lane.b32.xlu0 %v550, 16
    %v557 = vpop.permute.xlu0 %556
    %v559 = vsel %vm223, %v553, %v557
    %560 = vrot.lane.b32.xlu0 %v443, 112
    %v561 = vpop.permute.xlu0 %560
    %v563 = vsel %vm345, %v559, %v561
    %v565 = vsel %vm115, %v563, 0
    %567 = vmatprep.subr.mxu0 0.0
    %568 = vmatpush1.msra.mxu0 %v90
    %569 = vmatprep.subr.mxu0 0.0
    %570 = vmatpush1.msra.mxu0 %v91
    %571 = vmatprep.subr.mxu0 0.0
    %572 = vmatpush1.msra.mxu0 %v92
    %573 = vmatprep.subr.mxu0 0.0
    %574 = vmatpush1.msra.mxu0 %v93
    %575 = vmatprep.subr.mxu0 0.0
    %576 = vmatpush1.msra.mxu0 %v94
    %577 = vmatprep.subr.mxu0 0.0
    %578 = vmatpush1.msra.mxu0 %v95
    %579 = vmatprep.subr.mxu0 0.0
    %580 = vmatpush1.msra.mxu0 0.0
    %581 = vmatprep.subr.mxu0 0.0
    %582 = vmatpush1.msra.mxu0 0.0
    %583 = vmatprep.subr.mxu0 0.0
    %584 = vmatpush1.msra.mxu0 0.0
    %585 = vmatprep.subr.mxu0 0.0
    %586 = vmatpush1.msra.mxu0 0.0
    %587 = vmatprep.subr.mxu0 0.0
    %588 = vmatpush1.msra.mxu0 0.0
    %589 = vmatprep.subr.mxu0 0.0
    %590 = vmatpush1.msra.mxu0 0.0
    %591 = vmatprep.subr.mxu0 0.0
    %592 = vmatpush1.msra.mxu0 0.0
    %593 = vmatprep.subr.mxu0 0.0
    %594 = vmatpush1.msra.mxu0 0.0
    %595 = vmatprep.subr.mxu0 0.0
    %596 = vmatpush1.msra.mxu0 0.0
    %597 = vmatprep.subr.mxu0 0.0
    %598 = vmatpush1.msra.mxu0 0.0
    %599 = vmatprep.subr.mxu0 0.0
    %600 = vmatpush1.msra.mxu0 0.0
    %601 = vmatprep.subr.mxu0 0.0
    %602 = vmatpush1.msra.mxu0 0.0
    %603 = vmatprep.subr.mxu0 0.0
    %604 = vmatpush1.msra.mxu0 0.0
    %605 = vmatprep.subr.mxu0 0.0
    %606 = vmatpush1.msra.mxu0 0.0
    %607 = vmatprep.subr.mxu0 0.0
    %608 = vmatpush1.msra.mxu0 0.0
    %609 = vmatprep.subr.mxu0 0.0
    %610 = vmatpush1.msra.mxu0 0.0
    %611 = vmatprep.subr.mxu0 0.0
    %612 = vmatpush1.msra.mxu0 0.0
    %613 = vmatprep.subr.mxu0 0.0
    %614 = vmatpush1.msra.mxu0 0.0
    %615 = vmatprep.subr.mxu0 0.0
    %616 = vmatpush1.msra.mxu0 0.0
    %617 = vmatprep.subr.mxu0 0.0
    %618 = vmatpush1.msra.mxu0 0.0
    %619 = vmatprep.subr.mxu0 0.0
    %620 = vmatpush1.msra.mxu0 0.0
    %621 = vmatprep.subr.mxu0 0.0
    %622 = vmatpush1.msra.mxu0 0.0
    %623 = vmatprep.subr.mxu0 0.0
    %624 = vmatpush1.msra.mxu0 0.0
    %625 = vmatprep.subr.mxu0 0.0
    %626 = vmatpush1.msra.mxu0 0.0
    %627 = vmatprep.subr.mxu0 0.0
    %628 = vmatpush1.msra.mxu0 0.0
    %629 = vmatprep.subr.mxu0 0.0
    %630 = vmatpush1.msra.mxu0 0.0
    %631 = vmatprep.mubr.f32.mxu0 0.0
    %632 = vmatmul.mubr.f32.gmra.mrb[0].mxu0 %v565
    %v633 = vpop.f32.mrb[0].mxu0
    %v634 = vadd.f32 %v113, %v633
    %v635 = vpop.f32.mrb[0].mxu0
    %636 = vdwg.mxu0
    %v637 = vxor.u32 %v634, 2147483648
    %v638 = vmul.f32 %v637, 1.442695
    %v639 = vpow.pop %v638
    %v640 = vadd.f32 %v639, 1.0
    %v641 = vrcp.pop %v640
    %v642 = vmul.f32 1.0, %v641
    %v643 = vtanh.pop %v634
    %v644 = vmul.f32 %v642, %v437
    %646 = vrot.lane.b32.xlu0 %v643, 96
    %v647 = vpop.permute.xlu0 %646
    %v649 = vmul.f32 %v642, %v647
    %651 = vrot.lane.b32.xlu0 %v649, 16
    %v652 = vpop.permute.xlu0 %651
    %v654 = vadd.f32 %v644, %v652
    %v655 = vtanh.pop %v654
    %657 = vrot.lane.b32.xlu0 %v655, 32
    %v658 = vpop.permute.xlu0 %657
    %v660 = vmul.f32 %v642, %v658
    %v661 = vpack.c.bf16 %v660, %v660
    %663 = vrot.lane.b32.xlu0 %v661, 80
    %v664 = vpop.permute.xlu0 %663
    %v666 = vsel %vm223, %v664, 0
    %668 = vmatprep.subr.bf16.mxu0 0
    %669 = vmatpush1.bf16.msra.mxu0 %v221
    %670 = vmatprep.subr.bf16.mxu0 0
    %671 = vmatpush1.bf16.msra.mxu0 0
    %672 = vmatprep.subr.bf16.mxu0 0
    %673 = vmatpush1.bf16.msra.mxu0 0
    %674 = vmatprep.subr.bf16.mxu0 0
    %675 = vmatpush1.bf16.msra.mxu0 0
    %676 = vmatprep.subr.bf16.mxu0 0
    %677 = vmatpush1.bf16.msra.mxu0 0
    %678 = vmatprep.subr.bf16.mxu0 0
    %679 = vmatpush1.bf16.msra.mxu0 0
    %680 = vmatprep.subr.bf16.mxu0 0
    %681 = vmatpush1.bf16.msra.mxu0 0
    %682 = vmatprep.subr.bf16.mxu0 0
    %683 = vmatpush1.bf16.msra.mxu0 0
    %684 = vmatprep.subr.bf16.mxu0 0
    %685 = vmatpush1.bf16.msra.mxu0 0
    %686 = vmatprep.subr.bf16.mxu0 0
    %687 = vmatpush1.bf16.msra.mxu0 0
    %688 = vmatprep.subr.bf16.mxu0 0
    %689 = vmatpush1.bf16.msra.mxu0 0
    %690 = vmatprep.subr.bf16.mxu0 0
    %691 = vmatpush1.bf16.msra.mxu0 0
    %692 = vmatprep.subr.bf16.mxu0 0
    %693 = vmatpush1.bf16.msra.mxu0 0
    %694 = vmatprep.subr.bf16.mxu0 0
    %695 = vmatpush1.bf16.msra.mxu0 0
    %696 = vmatprep.subr.bf16.mxu0 0
    %697 = vmatpush1.bf16.msra.mxu0 0
    %698 = vmatprep.subr.bf16.mxu0 0
    %699 = vmatpush1.bf16.msra.mxu0 0
    %700 = vmatprep.mubr.bf16.mxu0 0
    %701 = vmatmul.mubr.bf16.gmra.mrb[0].mxu0 %v666
    %v702 = vpop.f32.mrb[0].mxu0
    %v703 = vadd.f32 %v108, %v702
    %v704 = vpop.f32.mrb[0].mxu0
    %v705 = vpop.f32.mrb[0].mxu0
    %v706 = vpop.f32.mrb[0].mxu0
    %707 = vdwg.mxu0
    %v708 = vsel %vm223, %v703, -inf
    %709 = vmax.xlane.f32.xlu0 %v708
    %v710 = vpop.xlane.xlu0 %709
    %v711 = vsub.f32 %v703, %v710
    %v712 = vmul.f32 %v711, 1.442695
    %v713 = vpow.pop %v712
    %v714 = vsel %vm223, %v713, 0.0
    %715 = vadd.xlane.f32.xlu0 %v714
    %v716 = vpop.xlane.xlu0 %715
    %vm717 = vcmp.gt.f32.partialorder %v710, -1e+29
    %v718 = vsel %vm717, 1, 0
    %v719 = vcvt.s32.f32 %v718
    %v720 = vadd.f32 %v716, 1e-16
    %v721 = vrcp.pop %v720
    %v722 = vmul.f32 %v719, %v721
    %v723 = vpack.c.bf16 %v713, %v713
    %v725 = vsel %vm223, %v723, 0
    %727 = vmatprep.subr.bf16.mxu0 0
    %728 = vmatpush1.bf16.msra.mxu0 %v287
    %729 = vmatprep.subr.bf16.mxu0 0
    %730 = vmatpush1.bf16.msra.mxu0 0
    %731 = vmatprep.subr.bf16.mxu0 0
    %732 = vmatpush1.bf16.msra.mxu0 0
    %733 = vmatprep.subr.bf16.mxu0 0
    %734 = vmatpush1.bf16.msra.mxu0 0
    %735 = vmatprep.subr.bf16.mxu0 0
    %736 = vmatpush1.bf16.msra.mxu0 0
    %737 = vmatprep.subr.bf16.mxu0 0
    %738 = vmatpush1.bf16.msra.mxu0 0
    %739 = vmatprep.subr.bf16.mxu0 0
    %740 = vmatpush1.bf16.msra.mxu0 0
    %741 = vmatprep.subr.bf16.mxu0 0
    %742 = vmatpush1.bf16.msra.mxu0 0
    %743 = vmatprep.subr.bf16.mxu0 0
    %744 = vmatpush1.bf16.msra.mxu0 0
    %745 = vmatprep.subr.bf16.mxu0 0
    %746 = vmatpush1.bf16.msra.mxu0 0
    %747 = vmatprep.subr.bf16.mxu0 0
    %748 = vmatpush1.bf16.msra.mxu0 0
    %749 = vmatprep.subr.bf16.mxu0 0
    %750 = vmatpush1.bf16.msra.mxu0 0
    %751 = vmatprep.subr.bf16.mxu0 0
    %752 = vmatpush1.bf16.msra.mxu0 0
    %753 = vmatprep.subr.bf16.mxu0 0
    %754 = vmatpush1.bf16.msra.mxu0 0
    %755 = vmatprep.subr.bf16.mxu0 0
    %756 = vmatpush1.bf16.msra.mxu0 0
    %757 = vmatprep.subr.bf16.mxu0 0
    %758 = vmatpush1.bf16.msra.mxu0 0
    %759 = vmatprep.mubr.bf16.mxu0 0
    %760 = vmatmul.mubr.bf16.gmra.mrb[0].mxu0 %v725
    %v761 = vpop.f32.mrb[0].mxu0
    %v762 = vadd.f32 0.0, %v761
    %v763 = vpop.f32.mrb[0].mxu0
    %v764 = vpop.f32.mrb[0].mxu0
    %v765 = vpop.f32.mrb[0].mxu0
    %766 = vdwg.mxu0
    %v767 = vmul.f32 %v762, %v722
    %769 = vrot.lane.b32.xlu0 %v660, 80
    %v770 = vpop.permute.xlu0 %769
    %773 = vrot.lane.b32.xlu0 %v767, 16
    %v774 = vpop.permute.xlu0 %773
    %v776 = vsel %vm223, %v770, %v774
    %v777 = vsel %vm345, %v776, 0.0
    %778 = vst [vmem:[#allocation11] sm:$0xff] %v777
    // Predicated region
    $region42: #{tpu_custom_call.1} parent=1 // pred_check
      _
    $region43: #{tpu_custom_call.1} parent=1 // pred_check_branch
      %780 = sbr.rel (0) target = $region45
    $region44: #{tpu_custom_call.1} parent=1 // pred_region
      %s782 = ssub.s32 128, 128
      %783 = vsyncadd [#allocation4], %s782
      %s785 = sshll.u32 [#allocation11], 4
      %s786 = int_to_ptr.vmem [resolvable:$true] %s785
      %788 = dma.vmem_to_hbm [thread:$0]  %s786, 128, %s5, [#allocation4]
    $region45: #{tpu_custom_call.1} parent=1 // pred_fallthru
      _
    // Predicated region
    $region46: #{tpu_custom_call.1} parent=1 // pred_check
      _
    $region47: #{tpu_custom_call.1} parent=1 // pred_check_branch
      %790 = sbr.rel (0) target = $region49
    $region48: #{tpu_custom_call.1} parent=1 // pred_region
      %791 = dma.done [#allocation4], 128
    $region49: #{tpu_custom_call.1} parent=1 // pred_fallthru
      _
    %792 = vsyncpa [#allocation3], 1
    %793 = vsyncpa [#allocation6], 1
    %794 = vsyncpa [#allocation9], 1
    %795 = vsyncpa [#allocation4], 1

</llo_original>
